<compile_context>
chip_gen: v5e
topology: v5e:2x2
jax: 0.10.0
libtpu: 0.0.40
codegen_flags: <defaults>
</compile_context>

<pallas_src>
import jax
import jax.numpy as jnp
from jax.experimental import pallas as pl
from jax.experimental.pallas import tpu as pltpu

_NEG_LARGE = -1e30  # finite "-inf" used to mask the ragged class tail


def _round_up(x: int, m: int) -> int:
    return ((x + m - 1) // m) * m


def _make_ce_kernel(tn: int, tc: int, c: int):
    c_rem = c % tc          # static: 0 => class axis divides evenly, no masking
    num_chunks = tc // 128  # static: number of 128-lane chunks per class tile

    def ce_kernel(tlogit_ref, logits_ref, nll_ref, m_scr, l_scr):
        j = pl.program_id(1)          # class-block index (reduction axis)
        nj = pl.num_programs(1)

        @pl.when(j == 0)
        def _init():
            m_scr[...] = jnp.full_like(m_scr, _NEG_LARGE)
            l_scr[...] = jnp.zeros_like(l_scr)

        if c_rem != 0:
            lane_ids = jax.lax.broadcasted_iota(jnp.int32, (tn, 128), 1)
            is_last = j == nj - 1

        def load_chunk(g):
            # Static lane-aligned slice of the VMEM tile -> (tn, 128).
            x = logits_ref[:, g * 128:(g + 1) * 128].astype(jnp.float32)
            # Mask only the chunks that can contain the ragged class tail
            # (static condition); non-final class blocks are always full.
            if c_rem != 0 and (g + 1) * 128 > c_rem:
                thr = jnp.where(is_last, c_rem - g * 128, 128)
                x = jnp.where(lane_ids < thr, x, _NEG_LARGE)
            return x

        # Phase 1: per-lane block max (elementwise VPU fold, no XLU).
        block_max = load_chunk(0)
        for g in range(1, num_chunks):
            block_max = jnp.maximum(block_max, load_chunk(g))

        m_old = m_scr[...]                       # (tn, 128)
        m_new = jnp.maximum(m_old, block_max)
        # Rescale the running per-lane sum once per class block.
        l_run = l_scr[...] * jnp.exp(m_old - m_new)

        # Phase 2: accumulate exp(x - m) per lane (1 sub + 1 exp + 1 add / elem).
        for g in range(num_chunks):
            l_run = l_run + jnp.exp(load_chunk(g) - m_new)

        m_scr[...] = m_new
        l_scr[...] = l_run

        @pl.when(j == nj - 1)
        def _finalize():
            # Single cross-lane (XLU) reduce per row block.
            m_lane = m_scr[...]
            m_row = jnp.max(m_lane, axis=-1, keepdims=True)            # (tn, 1)
            l_row = jnp.sum(l_scr[...] * jnp.exp(m_lane - m_row),
                            axis=-1, keepdims=True)                    # (tn, 1)
            nll = m_row + jnp.log(l_row) - tlogit_ref[...]
            nll_ref[...] = nll.astype(nll_ref.dtype)

    return ce_kernel


def criterion_forward(pred_logits: jax.Array, target_indices: jax.Array,
                      cross_entropy_loss_coeff: float = 1.0,
                      block_rows: int = 256, block_cols: int | None = None):
    """Returns dict(total_loss, cross_entropy_loss) — the Criterion.Losses fields."""
    n, c = pred_logits.shape
    itemsize = jnp.dtype(pred_logits.dtype).itemsize

    if block_cols is None:
        # Target ~8 MiB per logits buffer at the input dtype (x2 double-buffered).
        block_cols = max(128, (8 * 1024 * 1024 // (block_rows * itemsize)) // 128 * 128)

    tn = _round_up(min(block_rows, _round_up(n, 8)), 8)
    # Prefer >=2 row blocks so the "parallel" row axis can shard across the two
    # TensorCores on v7x; negligible cost on single-core chips.
    if n > 8 and pl.cdiv(n, tn) < 2:
        tn = _round_up(pl.cdiv(n, 2), 8)
    tc = _round_up(min(block_cols, _round_up(c, 128)), 128)

    targets = target_indices.reshape(n, 1).astype(jnp.int32)
    # Hoist the target-logit gather out of the kernel hot loop: an N-element
    # gather is negligible HBM next to the (N, C) logits stream.
    tgt_logit = jnp.take_along_axis(pred_logits, targets, axis=1).astype(jnp.float32)

    grid = (pl.cdiv(n, tn), pl.cdiv(c, tc))

    cost = pl.CostEstimate(
        flops=int(4 * n * c),
        transcendentals=int(n * c),
        bytes_accessed=int(n * c * itemsize + 2 * n * 4 + n * 4),
    )

    nll = pl.pallas_call(
        _make_ce_kernel(tn, tc, c),
        out_shape=jax.ShapeDtypeStruct((n, 1), jnp.float32),
        grid_spec=pltpu.PrefetchScalarGridSpec(
            num_scalar_prefetch=0,
            grid=grid,
            in_specs=[
                pl.BlockSpec((tn, 1), lambda i, j: (i, 0)),    # target logit (finalize only)
                pl.BlockSpec((tn, tc), lambda i, j: (i, j)),   # logits tile (streamed)
            ],
            out_specs=pl.BlockSpec((tn, 1), lambda i, j: (i, 0)),
            scratch_shapes=[
                pltpu.VMEM((tn, 128), jnp.float32),   # per-lane running max
                pltpu.VMEM((tn, 128), jnp.float32),   # per-lane running sum(exp)
            ],
        ),
        compiler_params=pltpu.CompilerParams(
            dimension_semantics=("parallel", "arbitrary"),
            vmem_limit_bytes=48 * 1024 * 1024,
        ),
        cost_estimate=cost,
    )(tgt_logit, pred_logits)

    ce = jnp.mean(nll)                                   # mean reduction over N
    total = ce * jnp.float32(cross_entropy_loss_coeff)
    return {"total_loss": total, "cross_entropy_loss": ce}


def _reference(logits, targets, coeff):
    log_probs = jax.nn.log_softmax(logits.astype(jnp.float32), axis=-1)
    ce = -jnp.mean(log_probs[jnp.arange(logits.shape[0]), targets])
    return ce * coeff, ce


if __name__ == "__main__":
    key = jax.random.PRNGKey(0)
    k1, k2, k3, k4, k5, k6 = jax.random.split(key, 6)
    coeff = 0.5

    # 1) Small demo shape consistent with the module: batch of 8 samples, 32 classes.
    N, C = 8, 32
    logits = jax.random.normal(k1, (N, C), dtype=jnp.float32)
    targets = jax.random.randint(k2, (N,), 0, C, dtype=jnp.int32)
    losses = criterion_forward(logits, targets, cross_entropy_loss_coeff=coeff)
    jax.block_until_ready(losses["total_loss"])
    jax.block_until_ready(losses["cross_entropy_loss"])
    ref_total, ref_ce = _reference(logits, targets, coeff)
    assert jnp.allclose(losses["cross_entropy_loss"], ref_ce, atol=1e-5, rtol=1e-5), (
        losses["cross_entropy_loss"], ref_ce)
    assert jnp.allclose(losses["total_loss"], ref_total, atol=1e-5, rtol=1e-5), (
        losses["total_loss"], ref_total)

    # 2) Ragged 2-D grid: multiple row + class blocks, ragged tails on both axes
    #    (no padding anywhere; in-kernel class-tail masking).
    N2, C2 = 300, 300
    logits2 = jax.random.normal(k3, (N2, C2), dtype=jnp.float32)
    targets2 = jax.random.randint(k4, (N2,), 0, C2, dtype=jnp.int32)
    losses2 = criterion_forward(logits2, targets2, cross_entropy_loss_coeff=coeff,
                                block_rows=128, block_cols=128)
    jax.block_until_ready(losses2["total_loss"])
    ref_total2, ref_ce2 = _reference(logits2, targets2, coeff)
    assert jnp.allclose(losses2["cross_entropy_loss"], ref_ce2, atol=1e-4, rtol=1e-5), (
        losses2["cross_entropy_loss"], ref_ce2)
    assert jnp.allclose(losses2["total_loss"], ref_total2, atol=1e-4, rtol=1e-5), (
        losses2["total_loss"], ref_total2)

    # 3) bf16 logits (bf16 streamed from HBM, f32 compute) + partially-masked
    #    tail chunk across multiple class blocks.
    N3, C3 = 48, 1000
    logits3 = jax.random.normal(k5, (N3, C3), dtype=jnp.float32).astype(jnp.bfloat16)
    targets3 = jax.random.randint(k6, (N3,), 0, C3, dtype=jnp.int32)
    losses3 = criterion_forward(logits3, targets3, cross_entropy_loss_coeff=coeff,
                                block_rows=32, block_cols=256)
    jax.block_until_ready(losses3["total_loss"])
    ref_total3, ref_ce3 = _reference(logits3, targets3, coeff)
    assert jnp.allclose(losses3["cross_entropy_loss"], ref_ce3, atol=1e-3, rtol=1e-3), (
        losses3["cross_entropy_loss"], ref_ce3)
    assert jnp.allclose(losses3["total_loss"], ref_total3, atol=1e-3, rtol=1e-3), (
        losses3["total_loss"], ref_total3)

    print("KERNEL_OK")
</pallas_src>

<mosaic_0001>
module attributes {stable_mosaic.version = 11 : i64} {
  func.func @ce_kernel(%arg0: i32, %arg1: i32, %arg2: memref<8x1xf32, #tpu.memory_space<vmem>>, %arg3: memref<8x128xf32, #tpu.memory_space<vmem>>, %arg4: memref<8x1xf32, #tpu.memory_space<vmem>>, %arg5: memref<8x128xf32, #tpu.memory_space<vmem>>, %arg6: memref<8x128xf32, #tpu.memory_space<vmem>>) attributes {dimension_semantics = [#tpu.dimension_semantics<parallel>, #tpu.dimension_semantics<arbitrary>], iteration_bounds = array<i64: 1, 1>, scalar_prefetch = 0 : i64, scratch_operands = 2 : i64, tpu.core_type = #tpu.core_type<tc>, window_params = [{transform_indices = @transform_0, window_bounds = array<i64: 8, 1>}, {transform_indices = @transform_1, window_bounds = array<i64: 8, 128>}, {transform_indices = @transform_2, window_bounds = array<i64: 8, 1>}]} {
    %c0_i32 = arith.constant 0 : i32
    %0 = arith.cmpi eq, %arg1, %c0_i32 : i32
    %1 = arith.extui %0 : i1 to i32
    %c0_i32_0 = arith.constant 0 : i32
    %2 = arith.cmpi ne, %1, %c0_i32_0 : i32
    scf.if %2 {
      %cst_18 = arith.constant -1.000000e+30 : f32
      %31 = vector.broadcast %cst_18 : f32 to vector<8x128xf32>
      %c0_19 = arith.constant 0 : index
      %c0_20 = arith.constant 0 : index
      %32 = vector.load %arg5[%c0_19, %c0_20] : memref<8x128xf32, #tpu.memory_space<vmem>>, vector<8x128xf32>
      tpu.vector_store %arg5[%c0_19, %c0_20], %31 {strides = array<i32>} : memref<8x128xf32, #tpu.memory_space<vmem>>, vector<8x128xf32>,
      %cst_21 = arith.constant 0.000000e+00 : f32
      %33 = vector.broadcast %cst_21 : f32 to vector<8x128xf32>
      %c0_22 = arith.constant 0 : index
      %c0_23 = arith.constant 0 : index
      %34 = vector.load %arg6[%c0_22, %c0_23] : memref<8x128xf32, #tpu.memory_space<vmem>>, vector<8x128xf32>
      tpu.vector_store %arg6[%c0_22, %c0_23], %33 {strides = array<i32>} : memref<8x128xf32, #tpu.memory_space<vmem>>, vector<8x128xf32>,
    } else {
    }
    %3 = tpu.iota {dimensions = array<i32: 1>} : vector<8x128xi32>
    %c0_i32_1 = arith.constant 0 : i32
    %4 = arith.cmpi eq, %arg1, %c0_i32_1 : i32
    %c0 = arith.constant 0 : index
    %c0_2 = arith.constant 0 : index
    %5 = vector.load %arg3[%c0, %c0_2] : memref<8x128xf32, #tpu.memory_space<vmem>>, vector<8x128xf32>
    %c32_i32 = arith.constant 32 : i32
    %c128_i32 = arith.constant 128 : i32
    %6 = arith.select %4, %c32_i32, %c128_i32 : i32
    %7 = vector.broadcast %6 : i32 to vector<8x128xi32>
    %8 = arith.cmpi slt, %3, %7 : vector<8x128xi32>
    %cst = arith.constant -1.000000e+30 : f32
    %9 = vector.broadcast %cst : f32 to vector<8x128xf32>
    %10 = arith.select %8, %5, %9 : vector<8x128xi1>, vector<8x128xf32>
    %c0_3 = arith.constant 0 : index
    %c0_4 = arith.constant 0 : index
    %11 = vector.load %arg5[%c0_3, %c0_4] : memref<8x128xf32, #tpu.memory_space<vmem>>, vector<8x128xf32>
    %12 = arith.maximumf %11, %10 : vector<8x128xf32>
    %c0_5 = arith.constant 0 : index
    %c0_6 = arith.constant 0 : index
    %13 = vector.load %arg6[%c0_5, %c0_6] : memref<8x128xf32, #tpu.memory_space<vmem>>, vector<8x128xf32>
    %14 = arith.subf %11, %12 : vector<8x128xf32>
    %15 = math.exp %14 : vector<8x128xf32>
    %16 = arith.mulf %13, %15 : vector<8x128xf32>
    %c0_7 = arith.constant 0 : index
    %c0_8 = arith.constant 0 : index
    %17 = vector.load %arg3[%c0_7, %c0_8] : memref<8x128xf32, #tpu.memory_space<vmem>>, vector<8x128xf32>
    %c32_i32_9 = arith.constant 32 : i32
    %c128_i32_10 = arith.constant 128 : i32
    %18 = arith.select %4, %c32_i32_9, %c128_i32_10 : i32
    %19 = vector.broadcast %18 : i32 to vector<8x128xi32>
    %20 = arith.cmpi slt, %3, %19 : vector<8x128xi32>
    %cst_11 = arith.constant -1.000000e+30 : f32
    %21 = vector.broadcast %cst_11 : f32 to vector<8x128xf32>
    %22 = arith.select %20, %17, %21 : vector<8x128xi1>, vector<8x128xf32>
    %23 = arith.subf %22, %12 : vector<8x128xf32>
    %24 = math.exp %23 : vector<8x128xf32>
    %25 = arith.addf %16, %24 : vector<8x128xf32>
    %c0_12 = arith.constant 0 : index
    %c0_13 = arith.constant 0 : index
    %26 = vector.load %arg5[%c0_12, %c0_13] : memref<8x128xf32, #tpu.memory_space<vmem>>, vector<8x128xf32>
    tpu.vector_store %arg5[%c0_12, %c0_13], %12 {strides = array<i32>} : memref<8x128xf32, #tpu.memory_space<vmem>>, vector<8x128xf32>,
    %c0_14 = arith.constant 0 : index
    %c0_15 = arith.constant 0 : index
    %27 = vector.load %arg6[%c0_14, %c0_15] : memref<8x128xf32, #tpu.memory_space<vmem>>, vector<8x128xf32>
    tpu.vector_store %arg6[%c0_14, %c0_15], %25 {strides = array<i32>} : memref<8x128xf32, #tpu.memory_space<vmem>>, vector<8x128xf32>,
    %c0_i32_16 = arith.constant 0 : i32
    %28 = arith.cmpi eq, %arg1, %c0_i32_16 : i32
    %29 = arith.extui %28 : i1 to i32
    %c0_i32_17 = arith.constant 0 : i32
    %30 = arith.cmpi ne, %29, %c0_i32_17 : i32
    scf.if %30 {
      %c0_18 = arith.constant 0 : index
      %c0_19 = arith.constant 0 : index
      %31 = vector.load %arg5[%c0_18, %c0_19] : memref<8x128xf32, #tpu.memory_space<vmem>>, vector<8x128xf32>
      %cst_20 = arith.constant dense<0xFF800000> : vector<8xf32>
      %32 = vector.multi_reduction <maximumf>, %31, %cst_20 [1] : vector<8x128xf32> to vector<8xf32>
      %33 = vector.shape_cast %32 : vector<8xf32> to vector<8x1xf32>
      %c0_21 = arith.constant 0 : index
      %c0_22 = arith.constant 0 : index
      %34 = vector.load %arg6[%c0_21, %c0_22] : memref<8x128xf32, #tpu.memory_space<vmem>>, vector<8x128xf32>
      %35 = vector.broadcast %33 : vector<8x1xf32> to vector<8x128xf32>
      %36 = arith.subf %31, %35 : vector<8x128xf32>
      %37 = math.exp %36 : vector<8x128xf32>
      %38 = arith.mulf %34, %37 : vector<8x128xf32>
      %cst_23 = arith.constant dense<0.000000e+00> : vector<8xf32>
      %39 = vector.multi_reduction <add>, %38, %cst_23 [1] : vector<8x128xf32> to vector<8xf32>
      %40 = vector.shape_cast %39 : vector<8xf32> to vector<8x1xf32>
      %41 = math.log %40 : vector<8x1xf32>
      %42 = arith.addf %33, %41 : vector<8x1xf32>
      %c0_24 = arith.constant 0 : index
      %c0_25 = arith.constant 0 : index
      %43 = vector.load %arg2[%c0_24, %c0_25] : memref<8x1xf32, #tpu.memory_space<vmem>>, vector<8x1xf32>
      %44 = arith.subf %42, %43 : vector<8x1xf32>
      %c0_26 = arith.constant 0 : index
      %c0_27 = arith.constant 0 : index
      %45 = vector.load %arg4[%c0_26, %c0_27] : memref<8x1xf32, #tpu.memory_space<vmem>>, vector<8x1xf32>
      tpu.vector_store %arg4[%c0_26, %c0_27], %44 {strides = array<i32>} : memref<8x1xf32, #tpu.memory_space<vmem>>, vector<8x1xf32>,
    } else {
    }
    return
  }
  func.func @transform_0(%arg0: i32, %arg1: i32) -> (i32, i32) {
    %c0_i32 = arith.constant 0 : i32
    %c0_i32_0 = arith.constant 0 : i32
    return %arg0, %c0_i32 : i32, i32
  }
  func.func @transform_1(%arg0: i32, %arg1: i32) -> (i32, i32) {
    %c0_i32 = arith.constant 0 : i32
    return %arg0, %arg1 : i32, i32
  }
  func.func @transform_2(%arg0: i32, %arg1: i32) -> (i32, i32) {
    %c0_i32 = arith.constant 0 : i32
    %c0_i32_0 = arith.constant 0 : i32
    return %arg0, %c0_i32 : i32, i32
  }
}

</mosaic_0001>

<llo_original>
// kernel: tpu_custom_call.1
$region0: #{tpu_custom_call.1}
  #allocation0 [shape = 'u32[]', space=smem, size = 0x4, offset = 0x4, fixed_abs, tag = 'smem constant byte address 0x4 - core index']
  #allocation1 [shape = 'u32[72,128]{1,0:T(1,128)}', space=vmem, size = 0x9000, scoped, tag = 'internal scratch']
  #allocation2 [shape = 'f32[8,128]{1,0:T(8,128)}', space=vmem, size = 0x1000, scoped, tag = 'scratch operand']
  #allocation3 [shape = 'f32[8,128]{1,0:T(8,128)}', space=vmem, size = 0x1000, scoped, tag = 'scratch operand']
  %s0 = inlined_call_operand.vmem [shape: f32[8,1], index: 0, kind: input, shape index: {}]
  %s1 = inlined_call_operand.vmem [shape: f32[8,32], index: 1, kind: input, shape index: {}]
  %s2 = inlined_call_operand.vmem [shape: f32[8,1], index: 2, kind: output, shape index: {}]
  %s3 = sld [smem:[#allocation0]]
  $region26: #{tpu_custom_call.1} parent=0
    _
  %s5 = ssub.s32 1, %s3
  %s6 = scalar_select 0, %s5, %s3
  // Predicated region
  $region2: #{tpu_custom_call.1} parent=0 // pred_check
    _
  $region3: #{tpu_custom_call.1} parent=0 // pred_check_branch
    %8 = sbr.rel (0) target = $region5
  $region4: #{tpu_custom_call.1} parent=0 // pred_region
    _
  $region5: #{tpu_custom_call.1} parent=0 // pred_fallthru
    _
  // Predicated region
  $region6: #{tpu_custom_call.1} parent=0 // pred_check
    _
  $region7: #{tpu_custom_call.1} parent=0 // pred_check_branch
    %10 = sbr.rel (0) target = $region9
  $region8: #{tpu_custom_call.1} parent=0 // pred_region
    _
  $region9: #{tpu_custom_call.1} parent=0 // pred_fallthru
    _
  %p11 = scmp.eq.s32.totalorder 0, 0
  // Predicated region
  $region10: #{tpu_custom_call.1} parent=0 // pred_check
    %p12 = pneg %p11
  $region11: #{tpu_custom_call.1} parent=0 // pred_check_branch
    %14 = sbr.rel (%p12) target = $region13
  $region12: #{tpu_custom_call.1} parent=0 // pred_region
    %15 = vst [vmem:[#allocation2] sm:$0xff] -1e+30
    %16 = vst [vmem:[#allocation3] sm:$0xff] 0.0
  $region13: #{tpu_custom_call.1} parent=0 // pred_fallthru
    _
  %v17 = vlaneseq
  %v18 = vand.u32 %v17, 127
  %v19 = vld [vmem:[%s1] sm:$0xff]
  %s20 = scalar_select %p11, 32, 128
  %v21 = vstv %s20
  %vm22 = vcmp.lt.s32.totalorder %v18, %v21
  %v23 = vsel %vm22, %v19, -1e+30
  %v24 = vld [vmem:[#allocation2] sm:$0xff]
  %v25 = vmax.f32 %v24, %v23
  %v26 = vld [vmem:[#allocation3] sm:$0xff]
  %v27 = vsub.f32 %v24, %v25
  %v28 = vmul.f32 %v27, 1.442695
  %v29 = vpow.pop %v28
  %v30 = vmul.f32 %v26, %v29
  %v31 = vsub.f32 %v23, %v25
  %v32 = vmul.f32 %v31, 1.442695
  %v33 = vpow.pop %v32
  %v34 = vadd.f32 %v30, %v33
  %35 = vst [vmem:[#allocation2] sm:$0xff] %v25
  %36 = vst [vmem:[#allocation3] sm:$0xff] %v34
  // Predicated region
  $region14: #{tpu_custom_call.1} parent=0 // pred_check
    %p37 = pneg %p11
  $region15: #{tpu_custom_call.1} parent=0 // pred_check_branch
    %39 = sbr.rel (%p37) target = $region17
  $region16: #{tpu_custom_call.1} parent=0 // pred_region
    %v40 = vld [vmem:[#allocation2] sm:$0xff]
    %41 = vmax.xlane.f32.xlu0 %v40
    %v42 = vpop.xlane.xlu0 %41
    %v43 = vld [vmem:[#allocation3] sm:$0xff]
    %v44 = vsub.f32 %v40, %v42
    %v45 = vmul.f32 %v44, 1.442695
    %v46 = vpow.pop %v45
    %v47 = vmul.f32 %v43, %v46
    %48 = vadd.xlane.f32.xlu0 %v47
    %v49 = vpop.xlane.xlu0 %48
    %v50 = vlog2.pop %v49
    %v51 = vmul.f32 %v50, 0.6931472
    %v52 = vadd.f32 %v42, %v51
    %v53 = vld [vmem:[%s0] sm:$0xff]
    %v54 = vsub.f32 %v52, %v53
    %vm55 = vcmask 7168
    %56 = vst.msk [vmem:[%s2] sm:$0xff] %vm55, %v54
  $region17: #{tpu_custom_call.1} parent=0 // pred_fallthru
    _
  // Predicated region
  $region18: #{tpu_custom_call.1} parent=0 // pred_check
    _
  $region19: #{tpu_custom_call.1} parent=0 // pred_check_branch
    %58 = sbr.rel (0) target = $region21
  $region20: #{tpu_custom_call.1} parent=0 // pred_region
    _
  $region21: #{tpu_custom_call.1} parent=0 // pred_fallthru
    _
  // Predicated region
  $region22: #{tpu_custom_call.1} parent=0 // pred_check
    _
  $region23: #{tpu_custom_call.1} parent=0 // pred_check_branch
    %60 = sbr.rel (0) target = $region25
  $region24: #{tpu_custom_call.1} parent=0 // pred_region
    _
  $region25: #{tpu_custom_call.1} parent=0 // pred_fallthru
    _

</llo_original>
